<compile_context>
chip_gen: v6e
topology: v6e:2x2x1
jax: 0.10.0
libtpu: 0.0.40
codegen_flags: <defaults>
</compile_context>

<pallas_src>
import jax
import jax.numpy as jnp
from jax.experimental import pallas as pl
from jax.experimental.pallas import tpu as pltpu


def _round_up(x: int, m: int) -> int:
    return ((x + m - 1) // m) * m


def _choose_batch_tile(B: int, tb_max: int) -> int:
    """Batch tile: multiple of 8 sublanes; >=2 grid steps when B allows it."""
    if B <= 8:
        # Single block equal to the full batch dim (legal: equals array dim).
        return B
    tb = _round_up(pl.cdiv(B, 2), 8)  # at least 2 tiles -> both v7x TCs work
    return max(8, min(tb_max, tb))


def _mlp_kernel(x_ref, w1_ref, b1_ref, w2_ref, b2_ref, o_ref):
    # fc1: cast the x tile to the weight dtype (bf16) right before the MXU
    # dot; accumulate in f32, bias add + ReLU in f32 on the VPU.
    x = x_ref[...].astype(w1_ref.dtype)
    h = jnp.dot(x, w1_ref[...], preferred_element_type=jnp.float32)
    h = jnp.maximum(h + b1_ref[...], 0.0)
    # fc2 in bf16 (f32 accumulation); store the narrow (TB, C) tile directly.
    o_ref[...] = (
        jnp.dot(h.astype(w2_ref.dtype), w2_ref[...],
                preferred_element_type=jnp.float32)
        + b2_ref[...]
    )


def prepare_params(w1, b1, w2, b2, compute_dtype=jnp.bfloat16):
    """One-time parameter prep (hoisted out of the per-call path).

    w1: (input_dim, 64), b1: (64,), w2: (64, num_classes), b2: (num_classes,)
    (i.e. (in, out) layout -- transposed vs. PyTorch nn.Linear weights).
    """
    return (
        w1.astype(compute_dtype),
        b1.reshape(1, -1).astype(jnp.float32),
        w2.astype(compute_dtype),
        b2.reshape(1, -1).astype(jnp.float32),
    )


def mimic_model_forward(x, params, *, tb_max=1024):
    """Pallas forward of MIMICModel: relu(x @ w1 + b1) @ w2 + b2.

    x: (B, input_dim) float32; params: output of prepare_params().
    Returns (B, num_classes) float32 logits.
    """
    w1, b1_2d, w2, b2_2d = params
    B, D = x.shape
    H = w1.shape[1]
    C = w2.shape[1]

    TB = _choose_batch_tile(B, tb_max)
    grid = (pl.cdiv(B, TB),)

    itm_w = jnp.dtype(w1.dtype).itemsize
    cost = pl.CostEstimate(
        flops=2 * B * (D * H + H * C),
        transcendentals=0,
        bytes_accessed=(B * D * 4                      # x read (f32)
                        + D * H * itm_w + H * 4        # w1 + b1
                        + H * C * itm_w + C * 4        # w2 + b2
                        + B * C * 4),                  # logits write
    )

    return pl.pallas_call(
        _mlp_kernel,
        out_shape=jax.ShapeDtypeStruct((B, C), jnp.float32),
        grid=grid,
        in_specs=[
            pl.BlockSpec((TB, D), lambda i: (i, 0)),   # x: tiled over batch
            pl.BlockSpec((D, H), lambda i: (0, 0)),    # w1: VMEM-resident
            pl.BlockSpec((1, H), lambda i: (0, 0)),    # b1: VMEM-resident
            pl.BlockSpec((H, C), lambda i: (0, 0)),    # w2: VMEM-resident
            pl.BlockSpec((1, C), lambda i: (0, 0)),    # b2: VMEM-resident
        ],
        out_specs=pl.BlockSpec((TB, C), lambda i: (i, 0)),
        compiler_params=pltpu.CompilerParams(
            dimension_semantics=("parallel",),
        ),
        cost_estimate=cost,
    )(x, w1, b1_2d, w2, b2_2d)


def init_params(key, input_dim=100, hidden=64, num_classes=2):
    """Deterministic synthetic parameters (shapes match MIMICModel.__init__),
    stored in the (in, out) layout used by the kernel."""
    k1, k2, k3, k4 = jax.random.split(key, 4)
    w1 = jax.random.normal(k1, (input_dim, hidden), jnp.float32) * 0.05
    b1 = jax.random.normal(k2, (hidden,), jnp.float32) * 0.05
    w2 = jax.random.normal(k3, (hidden, num_classes), jnp.float32) * 0.05
    b2 = jax.random.normal(k4, (num_classes,), jnp.float32) * 0.05
    return w1, b1, w2, b2


if __name__ == "__main__":
    key = jax.random.PRNGKey(0)
    k_params, k_x = jax.random.split(key)

    batch, input_dim, num_classes = 8, 100, 2
    w1, b1, w2, b2 = init_params(k_params, input_dim=input_dim,
                                 num_classes=num_classes)
    x = jax.random.normal(k_x, (batch, input_dim), jnp.float32)

    params = prepare_params(w1, b1, w2, b2)          # one-time prep
    out = mimic_model_forward(x, params)
    out = jax.block_until_ready(out)

    # Reference 1: identical math (bf16 operands, f32 accumulation).
    xq, w1q, w2q = x.astype(jnp.bfloat16), w1.astype(jnp.bfloat16), w2.astype(jnp.bfloat16)
    h_q = jnp.maximum(
        jnp.dot(xq, w1q, preferred_element_type=jnp.float32) + b1, 0.0)
    ref_q = (jnp.dot(h_q.astype(jnp.bfloat16), w2q,
                     preferred_element_type=jnp.float32) + b2)

    # Reference 2: pure-f32 PyTorch-equivalent forward (looser tolerance,
    # checks bf16 quantization hasn't drifted beyond expected levels).
    h_f = jnp.maximum(jnp.dot(x, w1) + b1, 0.0)
    ref_f = jnp.dot(h_f, w2) + b2

    assert out.shape == (batch, num_classes)
    assert out.dtype == jnp.float32
    assert jnp.allclose(out, ref_q, atol=1e-4, rtol=1e-4)
    assert jnp.allclose(out, ref_f, atol=3e-2, rtol=3e-2)

    print("KERNEL_OK")
</pallas_src>

<mosaic_0001>
module attributes {stable_mosaic.version = 11 : i64} {
  func.func @_mlp_kernel(%arg0: i32, %arg1: memref<8x100xf32, #tpu.memory_space<vmem>>, %arg2: memref<100x64xbf16, #tpu.memory_space<vmem>>, %arg3: memref<1x64xf32, #tpu.memory_space<vmem>>, %arg4: memref<64x2xbf16, #tpu.memory_space<vmem>>, %arg5: memref<1x2xf32, #tpu.memory_space<vmem>>, %arg6: memref<8x2xf32, #tpu.memory_space<vmem>>) attributes {dimension_semantics = [#tpu.dimension_semantics<parallel>], iteration_bounds = array<i64: 1>, scalar_prefetch = 0 : i64, scratch_operands = 0 : i64, tpu.core_type = #tpu.core_type<tc>, window_params = [{transform_indices = @transform_0, window_bounds = array<i64: 8, 100>}, {pipeline_mode = #tpu.pipeline_mode<synchronous>, transform_indices = @transform_1, window_bounds = array<i64: 100, 64>}, {pipeline_mode = #tpu.pipeline_mode<synchronous>, transform_indices = @transform_2, window_bounds = array<i64: 1, 64>}, {pipeline_mode = #tpu.pipeline_mode<synchronous>, transform_indices = @transform_3, window_bounds = array<i64: 64, 2>}, {pipeline_mode = #tpu.pipeline_mode<synchronous>, transform_indices = @transform_4, window_bounds = array<i64: 1, 2>}, {transform_indices = @transform_5, window_bounds = array<i64: 8, 2>}]} {
    %c0 = arith.constant 0 : index
    %c0_0 = arith.constant 0 : index
    %0 = vector.load %arg1[%c0, %c0_0] : memref<8x100xf32, #tpu.memory_space<vmem>>, vector<8x100xf32>
    %1 = arith.truncf %0 : vector<8x100xf32> to vector<8x100xbf16>
    %c0_1 = arith.constant 0 : index
    %c0_2 = arith.constant 0 : index
    %2 = vector.load %arg2[%c0_1, %c0_2] : memref<100x64xbf16, #tpu.memory_space<vmem>>, vector<100x64xbf16>
    %cst = arith.constant dense<0.000000e+00> : vector<8x64xf32>
    %3 = tpu.matmul %1, %2, %cst {dimension_numbers = #tpu.dot_dimension_numbers<[1], [0], [0], [1], [0, 0, 1, 1], [], []>} : vector<8x100xbf16>, vector<100x64xbf16>, vector<8x64xf32> -> vector<8x64xf32>
    %c0_3 = arith.constant 0 : index
    %c0_4 = arith.constant 0 : index
    %4 = vector.load %arg3[%c0_3, %c0_4] : memref<1x64xf32, #tpu.memory_space<vmem>>, vector<1x64xf32>
    %5 = vector.broadcast %4 : vector<1x64xf32> to vector<8x64xf32>
    %6 = arith.addf %3, %5 : vector<8x64xf32>
    %cst_5 = arith.constant 0.000000e+00 : f32
    %7 = vector.broadcast %cst_5 : f32 to vector<8x64xf32>
    %8 = arith.maximumf %6, %7 : vector<8x64xf32>
    %9 = arith.truncf %8 : vector<8x64xf32> to vector<8x64xbf16>
    %c0_6 = arith.constant 0 : index
    %c0_7 = arith.constant 0 : index
    %10 = vector.load %arg4[%c0_6, %c0_7] : memref<64x2xbf16, #tpu.memory_space<vmem>>, vector<64x2xbf16>
    %cst_8 = arith.constant dense<0.000000e+00> : vector<8x2xf32>
    %11 = tpu.matmul %9, %10, %cst_8 {dimension_numbers = #tpu.dot_dimension_numbers<[1], [0], [0], [1], [0, 0, 1, 1], [], []>} : vector<8x64xbf16>, vector<64x2xbf16>, vector<8x2xf32> -> vector<8x2xf32>
    %c0_9 = arith.constant 0 : index
    %c0_10 = arith.constant 0 : index
    %12 = vector.load %arg5[%c0_9, %c0_10] : memref<1x2xf32, #tpu.memory_space<vmem>>, vector<1x2xf32>
    %13 = vector.broadcast %12 : vector<1x2xf32> to vector<8x2xf32>
    %14 = arith.addf %11, %13 : vector<8x2xf32>
    %c0_11 = arith.constant 0 : index
    %c0_12 = arith.constant 0 : index
    %15 = vector.load %arg6[%c0_11, %c0_12] : memref<8x2xf32, #tpu.memory_space<vmem>>, vector<8x2xf32>
    tpu.vector_store %arg6[%c0_11, %c0_12], %14 {strides = array<i32>} : memref<8x2xf32, #tpu.memory_space<vmem>>, vector<8x2xf32>,
    return
  }
  func.func @transform_0(%arg0: i32) -> (i32, i32) {
    %c0_i32 = arith.constant 0 : i32
    %c0_i32_0 = arith.constant 0 : i32
    return %arg0, %c0_i32 : i32, i32
  }
  func.func @transform_1(%arg0: i32) -> (i32, i32) {
    %c0_i32 = arith.constant 0 : i32
    %c0_i32_0 = arith.constant 0 : i32
    %c0_i32_1 = arith.constant 0 : i32
    return %c0_i32, %c0_i32_0 : i32, i32
  }
  func.func @transform_2(%arg0: i32) -> (i32, i32) {
    %c0_i32 = arith.constant 0 : i32
    %c0_i32_0 = arith.constant 0 : i32
    %c0_i32_1 = arith.constant 0 : i32
    return %c0_i32, %c0_i32_0 : i32, i32
  }
  func.func @transform_3(%arg0: i32) -> (i32, i32) {
    %c0_i32 = arith.constant 0 : i32
    %c0_i32_0 = arith.constant 0 : i32
    %c0_i32_1 = arith.constant 0 : i32
    return %c0_i32, %c0_i32_0 : i32, i32
  }
  func.func @transform_4(%arg0: i32) -> (i32, i32) {
    %c0_i32 = arith.constant 0 : i32
    %c0_i32_0 = arith.constant 0 : i32
    %c0_i32_1 = arith.constant 0 : i32
    return %c0_i32, %c0_i32_0 : i32, i32
  }
  func.func @transform_5(%arg0: i32) -> (i32, i32) {
    %c0_i32 = arith.constant 0 : i32
    %c0_i32_0 = arith.constant 0 : i32
    return %arg0, %c0_i32 : i32, i32
  }
}

</mosaic_0001>

<llo_original>
// kernel: tpu_custom_call.1
$region0: #{tpu_custom_call.1}
  #allocation0 [shape = 'u32[]', space=smem, size = 0x4, offset = 0x4, fixed_abs, tag = 'smem constant byte address 0x4 - core index']
  #allocation1 [shape = 'u32[144,128]{1,0:T(1,128)}', space=vmem, size = 0x12000, scoped, tag = 'internal scratch']
  %s0 = inlined_call_operand.vmem [shape: f32[8,100], index: 0, kind: input, shape index: {}]
  %s1 = inlined_call_operand.vmem [shape: bf16[100,64], index: 1, kind: input, shape index: {}]
  %s2 = inlined_call_operand.vmem [shape: f32[1,64], index: 2, kind: input, shape index: {}]
  %s3 = inlined_call_operand.vmem [shape: bf16[64,2], index: 3, kind: input, shape index: {}]
  %s4 = inlined_call_operand.vmem [shape: f32[1,2], index: 4, kind: input, shape index: {}]
  %s5 = inlined_call_operand.vmem [shape: f32[8,2], index: 5, kind: output, shape index: {}]
  %s6 = sld [smem:[#allocation0]]
  $region30: #{tpu_custom_call.1} parent=0
    _
  %s8 = ssub.s32 1, %s6
  %s9 = scalar_select 0, %s8, %s6
  // Predicated region
  $region2: #{tpu_custom_call.1} parent=0 // pred_check
    _
  $region3: #{tpu_custom_call.1} parent=0 // pred_check_branch
    %11 = sbr.rel (0) target = $region5
  $region4: #{tpu_custom_call.1} parent=0 // pred_region
    _
  $region5: #{tpu_custom_call.1} parent=0 // pred_fallthru
    _
  // Predicated region
  $region6: #{tpu_custom_call.1} parent=0 // pred_check
    _
  $region7: #{tpu_custom_call.1} parent=0 // pred_check_branch
    %13 = sbr.rel (0) target = $region9
  $region8: #{tpu_custom_call.1} parent=0 // pred_region
    _
  $region9: #{tpu_custom_call.1} parent=0 // pred_fallthru
    _
  // Predicated region
  $region10: #{tpu_custom_call.1} parent=0 // pred_check
    _
  $region11: #{tpu_custom_call.1} parent=0 // pred_check_branch
    %15 = sbr.rel (0) target = $region13
  $region12: #{tpu_custom_call.1} parent=0 // pred_region
    _
  $region13: #{tpu_custom_call.1} parent=0 // pred_fallthru
    _
  // Predicated region
  $region14: #{tpu_custom_call.1} parent=0 // pred_check
    _
  $region15: #{tpu_custom_call.1} parent=0 // pred_check_branch
    %17 = sbr.rel (0) target = $region17
  $region16: #{tpu_custom_call.1} parent=0 // pred_region
    _
  $region17: #{tpu_custom_call.1} parent=0 // pred_fallthru
    _
  // Predicated region
  $region18: #{tpu_custom_call.1} parent=0 // pred_check
    _
  $region19: #{tpu_custom_call.1} parent=0 // pred_check_branch
    %19 = sbr.rel (0) target = $region21
  $region20: #{tpu_custom_call.1} parent=0 // pred_region
    _
  $region21: #{tpu_custom_call.1} parent=0 // pred_fallthru
    _
  %v21 = vld [vmem:[%s0] sm:$0xff]
  %v22 = vpack.c.bf16 %v21, %v21
  %v23 = vld [vmem:[%s1] sm:$0xf]
  %v24 = vld [vmem:[%s1 + $0x4] sm:$0xf]
  %v25 = vld [vmem:[%s1 + $0x8] sm:$0xf]
  %v26 = vld [vmem:[%s1 + $0xc] sm:$0xf]
  %v27 = vld [vmem:[%s1 + $0x10] sm:$0xf]
  %v28 = vld [vmem:[%s1 + $0x14] sm:$0xf]
  %v29 = vld [vmem:[%s1 + $0x18] sm:$0xf]
  %v30 = vld [vmem:[%s1 + $0x1c] sm:$0xf]
  %v31 = vld [vmem:[%s1 + $0x20] sm:$0xf]
  %v32 = vld [vmem:[%s1 + $0x24] sm:$0xf]
  %v33 = vld [vmem:[%s1 + $0x28] sm:$0xf]
  %v34 = vld [vmem:[%s1 + $0x2c] sm:$0xf]
  %v35 = vld [vmem:[%s1 + $0x30] sm:$0x3]
  %v36 = vld [vmem:[%s2] sm:$0x1]
  %v38 = vlaneseq
  %v39 = vshrl.u32 %v38, 7
  %v40 = vsub.s32 0, %v39
  %v41 = vrot.slane %v36, %v40
  %v56 = vunpack.c.l.b16 %v23
  %v57 = vunpack.c.l.b16 %v24
  %v58 = vunpack.c.l.b16 %v25
  %v59 = vunpack.c.l.b16 %v26
  %v60 = vunpack.c.l.b16 %v27
  %v61 = vunpack.c.l.b16 %v28
  %v62 = vunpack.c.l.b16 %v29
  %v63 = vunpack.c.l.b16 %v30
  %v64 = vunpack.c.l.b16 %v31
  %v65 = vunpack.c.l.b16 %v32
  %v66 = vunpack.c.l.b16 %v33
  %v67 = vunpack.c.l.b16 %v34
  %v68 = vunpack.c.l.b16 %v35
  %v69 = vpack.c.b16 %v57, %v56
  %v70 = vpack.c.b16 %v59, %v58
  %v71 = vpack.c.b16 %v61, %v60
  %v72 = vpack.c.b16 %v63, %v62
  %v73 = vpack.c.b16 %v65, %v64
  %v74 = vpack.c.b16 %v67, %v66
  %v75 = vpack.c.b16 %v68, %v68
  %vm82 = vcmask 818176
  %v84 = vsel %vm82, %v22, 0
  %vm86 = vcmask 1041408
  %v88 = vsel %vm86, %v75, 0
  %90 = vmatprep.subr.bf16.mxu0 0
  %91 = vmatpush1.bf16.msra.mxu0 0
  %92 = vmatprep.subr.bf16.mxu0 0
  %93 = vmatpush1.bf16.msra.mxu0 %v88
  %94 = vmatprep.subr.bf16.mxu0 0
  %95 = vmatpush1.bf16.msra.mxu0 %v74
  %96 = vmatprep.subr.bf16.mxu0 0
  %97 = vmatpush1.bf16.msra.mxu0 %v73
  %98 = vmatprep.subr.bf16.mxu0 0
  %99 = vmatpush1.bf16.msra.mxu0 %v72
  %100 = vmatprep.subr.bf16.mxu0 0
  %101 = vmatpush1.bf16.msra.mxu0 %v71
  %102 = vmatprep.subr.bf16.mxu0 0
  %103 = vmatpush1.bf16.msra.mxu0 %v70
  %104 = vmatprep.subr.bf16.mxu0 0
  %105 = vmatpush1.bf16.msra.mxu0 %v69
  %106 = vmatprep.subr.bf16.mxu0 0
  %107 = vmatpush2.bf16.msra.mxu0 0
  %108 = vmatprep.subr.bf16.mxu0 0
  %109 = vmatpush2.bf16.msra.mxu0 0
  %110 = vmatprep.subr.bf16.mxu0 0
  %111 = vmatpush2.bf16.msra.mxu0 0
  %112 = vmatprep.subr.bf16.mxu0 0
  %113 = vmatpush2.bf16.msra.mxu0 0
  %114 = vmatprep.subr.bf16.mxu0 0
  %115 = vmatpush2.bf16.msra.mxu0 0
  %116 = vmatprep.subr.bf16.mxu0 0
  %117 = vmatpush2.bf16.msra.mxu0 0
  %118 = vmatprep.subr.bf16.mxu0 0
  %119 = vmatpush2.bf16.msra.mxu0 0
  %120 = vmatprep.subr.bf16.mxu0 0
  %121 = vmatpush2.bf16.msra.mxu0 0
  %122 = vmatprep.mubr.bf16.mxu0 0
  %123 = vmatmul.mubr.bf16.gmra.mxu0 %v84
  %v124 = vpop.f32.mrf.mxu0
  %v125 = vadd.f32 %v41, %v124
  %v126 = vpop.f32.mrf.mxu0
  %v127 = vpop.f32.mrf.mxu0
  %v128 = vpop.f32.mrf.mxu0
  %129 = vdwg.mxu0
  %v130 = vmax.f32 %v125, 0.0
  %v131 = vpack.c.bf16 %v130, %v130
  %v132 = vld [vmem:[%s3] sm:$0xf]
  %v133 = vld [vmem:[%s3 + $0x4] sm:$0xf]
  %v134 = vld [vmem:[%s3 + $0x8] sm:$0xf]
  %v135 = vld [vmem:[%s3 + $0xc] sm:$0xf]
  %v136 = vld [vmem:[%s3 + $0x10] sm:$0xf]
  %v137 = vld [vmem:[%s3 + $0x14] sm:$0xf]
  %v138 = vld [vmem:[%s3 + $0x18] sm:$0xf]
  %v139 = vld [vmem:[%s3 + $0x1c] sm:$0xf]
  %v140 = vld [vmem:[%s4] sm:$0x1]
  %v142 = vlaneseq
  %v143 = vshrl.u32 %v142, 7
  %v144 = vsub.s32 0, %v143
  %v145 = vrot.slane %v140, %v144
  %v155 = vunpack.c.l.b16 %v132
  %v156 = vunpack.c.l.b16 %v133
  %v157 = vunpack.c.l.b16 %v134
  %v158 = vunpack.c.l.b16 %v135
  %v159 = vunpack.c.l.b16 %v136
  %v160 = vunpack.c.l.b16 %v137
  %v161 = vunpack.c.l.b16 %v138
  %v162 = vunpack.c.l.b16 %v139
  %v163 = vpack.c.b16 %v156, %v155
  %v164 = vpack.c.b16 %v158, %v157
  %v165 = vpack.c.b16 %v160, %v159
  %v166 = vpack.c.b16 %v162, %v161
  %vm171 = vcmask 523264
  %v173 = vsel %vm171, %v131, 0
  %175 = vmatprep.subr.bf16.mxu0 0
  %176 = vmatpush1.bf16.msra.mxu0 0
  %177 = vmatprep.subr.bf16.mxu0 0
  %178 = vmatpush1.bf16.msra.mxu0 0
  %179 = vmatprep.subr.bf16.mxu0 0
  %180 = vmatpush1.bf16.msra.mxu0 0
  %181 = vmatprep.subr.bf16.mxu0 0
  %182 = vmatpush1.bf16.msra.mxu0 0
  %183 = vmatprep.subr.bf16.mxu0 0
  %184 = vmatpush1.bf16.msra.mxu0 %v166
  %185 = vmatprep.subr.bf16.mxu0 0
  %186 = vmatpush1.bf16.msra.mxu0 %v165
  %187 = vmatprep.subr.bf16.mxu0 0
  %188 = vmatpush1.bf16.msra.mxu0 %v164
  %189 = vmatprep.subr.bf16.mxu0 0
  %190 = vmatpush1.bf16.msra.mxu0 %v163
  %191 = vmatprep.subr.bf16.mxu0 0
  %192 = vmatpush2.bf16.msra.mxu0 0
  %193 = vmatprep.subr.bf16.mxu0 0
  %194 = vmatpush2.bf16.msra.mxu0 0
  %195 = vmatprep.subr.bf16.mxu0 0
  %196 = vmatpush2.bf16.msra.mxu0 0
  %197 = vmatprep.subr.bf16.mxu0 0
  %198 = vmatpush2.bf16.msra.mxu0 0
  %199 = vmatprep.subr.bf16.mxu0 0
  %200 = vmatpush2.bf16.msra.mxu0 0
  %201 = vmatprep.subr.bf16.mxu0 0
  %202 = vmatpush2.bf16.msra.mxu0 0
  %203 = vmatprep.subr.bf16.mxu0 0
  %204 = vmatpush2.bf16.msra.mxu0 0
  %205 = vmatprep.subr.bf16.mxu0 0
  %206 = vmatpush2.bf16.msra.mxu0 0
  %207 = vmatprep.mubr.bf16.mxu0 0
  %208 = vmatmul.mubr.bf16.gmra.mxu0 %v173
  %v209 = vpop.f32.mrf.mxu0
  %v210 = vadd.f32 %v145, %v209
  %v211 = vpop.f32.mrf.mxu0
  %v212 = vpop.f32.mrf.mxu0
  %v213 = vpop.f32.mrf.mxu0
  %214 = vdwg.mxu0
  %vm215 = vcmask 15360
  %216 = vst.msk [vmem:[%s5] sm:$0xff] %vm215, %v210
  // Predicated region
  $region22: #{tpu_custom_call.1} parent=0 // pred_check
    _
  $region23: #{tpu_custom_call.1} parent=0 // pred_check_branch
    %218 = sbr.rel (0) target = $region25
  $region24: #{tpu_custom_call.1} parent=0 // pred_region
    _
  $region25: #{tpu_custom_call.1} parent=0 // pred_fallthru
    _
  // Predicated region
  $region26: #{tpu_custom_call.1} parent=0 // pred_check
    _
  $region27: #{tpu_custom_call.1} parent=0 // pred_check_branch
    %220 = sbr.rel (0) target = $region29
  $region28: #{tpu_custom_call.1} parent=0 // pred_region
    _
  $region29: #{tpu_custom_call.1} parent=0 // pred_fallthru
    _

</llo_original>
